<compile_context>
chip_gen: v6e
topology: v6e:2x2x1
jax: 0.10.0
libtpu: 0.0.40
codegen_flags: <defaults>
</compile_context>

<pallas_src>
import functools

import jax
import jax.numpy as jnp
import numpy as np
from jax import lax
from jax.experimental import pallas as pl
from jax.experimental.pallas import tpu as pltpu


def _pair(v):
    if isinstance(v, (tuple, list)):
        a, b = v
        return int(a), int(b)
    return int(v), int(v)


# ---------------------------------------------------------------------------
# Pallas kernel
# ---------------------------------------------------------------------------
def _max_avg_pool_kernel(x_ref, o_ref, *, kh, kw, sh, sw, ph, pw, H, W, OH, OW):
    """x_ref: (TB, Hp, Wp) f32 tile of zero-padded images; o_ref: (TB, OH, OW)."""
    f32 = jnp.float32
    Hp = H + 2 * ph
    Wp = W + 2 * pw
    TB = x_ref.shape[0]
    neg = jnp.float32(-3.0e38)          # finite "-inf": safe through 0.0-weight matmuls
    inv_area = 1.0 / float(kh * kw)     # count_include_pad=True divisor

    # ---- one-hot selection matrices (built once per grid step from iota) ----
    # H direction: selH[k][oh, ihp] = 1.0  iff  ihp == oh*sh + k
    oh_ids = lax.broadcasted_iota(jnp.int32, (OH, Hp), 0)
    ihp_ids = lax.broadcasted_iota(jnp.int32, (OH, Hp), 1)
    selH = [(ihp_ids == oh_ids * sh + k).astype(f32) for k in range(kh)]
    selH_sum = selH[0]
    for m in selH[1:]:
        selH_sum = selH_sum + m

    # W direction: selW[k][iwp, ow] = 1.0  iff  iwp == ow*sw + k
    iwp_ids = lax.broadcasted_iota(jnp.int32, (Wp, OW), 0)
    ow_ids = lax.broadcasted_iota(jnp.int32, (Wp, OW), 1)
    selW = [(iwp_ids == ow_ids * sw + k).astype(f32) for k in range(kw)]
    selW_sum = selW[0]
    for m in selW[1:]:
        selW_sum = selW_sum + m

    # Validity masks for the max path (zero-padded borders must not win the max).
    if ph > 0:
        oh_col = lax.broadcasted_iota(jnp.int32, (OH, 1), 0)
        row_valid = [(oh_col * sh + k >= ph) & (oh_col * sh + k < H + ph)
                     for k in range(kh)]
    if pw > 0:
        ow_row = lax.broadcasted_iota(jnp.int32, (1, OW), 1)
        col_valid = [(ow_row * sw + k >= pw) & (ow_row * sw + k < W + pw)
                     for k in range(kw)]

    def body(t, carry):
        x = x_ref[t].astype(f32)                                        # (Hp, Wp)

        # --- H-direction window reduce (row selection via one-hot matmul, MXU) ---
        hmax = None
        for k in range(kh):
            pick = jnp.dot(selH[k], x, preferred_element_type=f32)      # (OH, Wp)
            if ph > 0:
                pick = jnp.where(row_valid[k], pick, neg)
            hmax = pick if hmax is None else jnp.maximum(hmax, pick)
        hsum = jnp.dot(selH_sum, x, preferred_element_type=f32)         # (OH, Wp)

        # --- W-direction window reduce (col selection via one-hot matmul, MXU) ---
        wmax = None
        for k in range(kw):
            pick = jnp.dot(hmax, selW[k], preferred_element_type=f32)   # (OH, OW)
            if pw > 0:
                pick = jnp.where(col_valid[k], pick, neg)
            wmax = pick if wmax is None else jnp.maximum(wmax, pick)
        wsum = jnp.dot(hsum, selW_sum, preferred_element_type=f32)      # (OH, OW)

        o_ref[t] = (0.5 * (wmax + wsum * inv_area)).astype(o_ref.dtype)
        return carry

    lax.fori_loop(0, TB, body, 0)


# ---------------------------------------------------------------------------
# Wrapper: layout view, VMEM-budgeted tiling, gridded pallas_call
# ---------------------------------------------------------------------------
def _choose_block_b(B, bytes_per_image, vmem_budget_bytes=4 * 1024 * 1024):
    # Pipeline double-buffers each block; keep 2*(in+out) per-step bytes well under
    # the v7x scoped-VMEM budget (64 MiB VMEM on v7x vs 128 MiB on v5e/v6e).
    tb = max(1, min(B, vmem_budget_bytes // max(1, 2 * bytes_per_image)))
    while B % tb:
        tb -= 1
    return tb


def custom_max_avg_pool2d(x, kernel_size, stride=None, padding=0, *, block_b=None):
    kh, kw = _pair(kernel_size)
    sh, sw = _pair(stride) if stride is not None else (kh, kw)
    ph, pw = _pair(padding)

    N, C, H, W = x.shape
    OH = (H + 2 * ph - kh) // sh + 1
    OW = (W + 2 * pw - kw) // sw + 1

    xf = x.astype(jnp.float32)
    if ph or pw:
        xf = jnp.pad(xf, ((0, 0), (0, 0), (ph, ph), (pw, pw)))
    Hp, Wp = H + 2 * ph, W + 2 * pw

    # Free view of the native NCHW byte layout: one "image" per (n, c) pair.
    B = N * C
    xb = xf.reshape(B, Hp, Wp)

    if block_b is None:
        block_b = _choose_block_b(B, 4 * (Hp * Wp + OH * OW))
    else:
        block_b = max(1, min(int(block_b), B))
        while B % block_b:
            block_b -= 1

    kernel = functools.partial(
        _max_avg_pool_kernel, kh=kh, kw=kw, sh=sh, sw=sw, ph=ph, pw=pw,
        H=H, W=W, OH=OH, OW=OW)

    # NOTE: at toy sizes the output lane width is OW=8 (masked stores); at real
    # feature-map sizes OW is ~112-256 and the stores are lane-dense.
    out = pl.pallas_call(
        kernel,
        out_shape=jax.ShapeDtypeStruct((B, OH, OW), jnp.float32),
        grid=(B // block_b,),
        in_specs=[pl.BlockSpec((block_b, Hp, Wp), lambda i: (i, 0, 0))],
        out_specs=pl.BlockSpec((block_b, OH, OW), lambda i: (i, 0, 0)),
        compiler_params=pltpu.CompilerParams(
            dimension_semantics=("parallel",)),   # megacore sharding on v7x
    )(xb)

    # TODO(synk): ceil_mode / count_include_pad=False / divisor_override variants
    # are not implemented (the module uses the F.max_pool2d / F.avg_pool2d defaults).
    return out.reshape(N, C, OH, OW).astype(x.dtype)


# ---------------------------------------------------------------------------
# Pure-JAX reference (for correctness check)
# ---------------------------------------------------------------------------
def _ref_max_avg_pool2d(x, kernel_size, stride=None, padding=0):
    kh, kw = _pair(kernel_size)
    sh, sw = _pair(stride) if stride is not None else (kh, kw)
    ph, pw = _pair(padding)
    window = (1, 1, kh, kw)
    strides = (1, 1, sh, sw)
    pads = ((0, 0), (0, 0), (ph, ph), (pw, pw))
    xf = x.astype(jnp.float32)
    mx = lax.reduce_window(xf, -jnp.inf, lax.max, window, strides, pads)
    sm = lax.reduce_window(xf, 0.0, lax.add, window, strides, pads)
    return 0.5 * (mx + sm / float(kh * kw))


# ---------------------------------------------------------------------------
if __name__ == "__main__":
    key = jax.random.PRNGKey(0)
    x = jax.random.normal(key, (2, 4, 16, 16), jnp.float32)

    # Module default config: kernel_size=2 -> stride=2, padding=0.
    pool = jax.jit(functools.partial(custom_max_avg_pool2d, kernel_size=2,
                                     stride=None, padding=0, block_b=2))
    out = jax.block_until_ready(pool(x))
    ref = _ref_max_avg_pool2d(x, 2)
    assert out.shape == (2, 4, 8, 8), out.shape
    np.testing.assert_allclose(np.asarray(out), np.asarray(ref),
                               rtol=1e-5, atol=1e-5)

    # Overlapping-window + padded config (kernel=3, stride=2, padding=1).
    pool2 = jax.jit(functools.partial(custom_max_avg_pool2d, kernel_size=3,
                                      stride=2, padding=1))
    out2 = jax.block_until_ready(pool2(x))
    ref2 = _ref_max_avg_pool2d(x, 3, 2, 1)
    np.testing.assert_allclose(np.asarray(out2), np.asarray(ref2),
                               rtol=1e-5, atol=1e-5)

    print("KERNEL_OK")
</pallas_src>

<mosaic_0001>
module attributes {stable_mosaic.version = 11 : i64} {
  func.func @_max_avg_pool_kernel(%arg0: i32, %arg1: memref<2x16x16xf32, #tpu.memory_space<vmem>>, %arg2: memref<2x8x8xf32, #tpu.memory_space<vmem>>) attributes {dimension_semantics = [#tpu.dimension_semantics<parallel>], iteration_bounds = array<i64: 4>, scalar_prefetch = 0 : i64, scratch_operands = 0 : i64, tpu.core_type = #tpu.core_type<tc>, window_params = [{transform_indices = @transform_0, window_bounds = array<i64: 2, 16, 16>}, {transform_indices = @transform_1, window_bounds = array<i64: 2, 8, 8>}]} {
    %0 = tpu.iota {dimensions = array<i32: 0>} : vector<8x16xi32>
    %1 = tpu.iota {dimensions = array<i32: 1>} : vector<8x16xi32>
    %c2_i32 = arith.constant 2 : i32
    %2 = vector.broadcast %c2_i32 : i32 to vector<8x16xi32>
    %3 = arith.muli %0, %2 : vector<8x16xi32>
    %c0_i32 = arith.constant 0 : i32
    %4 = vector.broadcast %c0_i32 : i32 to vector<8x16xi32>
    %5 = arith.addi %3, %4 : vector<8x16xi32>
    %6 = arith.cmpi eq, %1, %5 : vector<8x16xi32>
    %7 = arith.extui %6 : vector<8x16xi1> to vector<8x16xi32>
    %8 = arith.sitofp %7 : vector<8x16xi32> to vector<8x16xf32>
    %c2_i32_0 = arith.constant 2 : i32
    %9 = vector.broadcast %c2_i32_0 : i32 to vector<8x16xi32>
    %10 = arith.muli %0, %9 : vector<8x16xi32>
    %c1_i32 = arith.constant 1 : i32
    %11 = vector.broadcast %c1_i32 : i32 to vector<8x16xi32>
    %12 = arith.addi %10, %11 : vector<8x16xi32>
    %13 = arith.cmpi eq, %1, %12 : vector<8x16xi32>
    %14 = arith.extui %13 : vector<8x16xi1> to vector<8x16xi32>
    %15 = arith.sitofp %14 : vector<8x16xi32> to vector<8x16xf32>
    %16 = arith.addf %8, %15 : vector<8x16xf32>
    %17 = tpu.iota {dimensions = array<i32: 0>} : vector<16x8xi32>
    %18 = tpu.iota {dimensions = array<i32: 1>} : vector<16x8xi32>
    %c2_i32_1 = arith.constant 2 : i32
    %19 = vector.broadcast %c2_i32_1 : i32 to vector<16x8xi32>
    %20 = arith.muli %18, %19 : vector<16x8xi32>
    %c0_i32_2 = arith.constant 0 : i32
    %21 = vector.broadcast %c0_i32_2 : i32 to vector<16x8xi32>
    %22 = arith.addi %20, %21 : vector<16x8xi32>
    %23 = arith.cmpi eq, %17, %22 : vector<16x8xi32>
    %24 = arith.extui %23 : vector<16x8xi1> to vector<16x8xi32>
    %25 = arith.sitofp %24 : vector<16x8xi32> to vector<16x8xf32>
    %c2_i32_3 = arith.constant 2 : i32
    %26 = vector.broadcast %c2_i32_3 : i32 to vector<16x8xi32>
    %27 = arith.muli %18, %26 : vector<16x8xi32>
    %c1_i32_4 = arith.constant 1 : i32
    %28 = vector.broadcast %c1_i32_4 : i32 to vector<16x8xi32>
    %29 = arith.addi %27, %28 : vector<16x8xi32>
    %30 = arith.cmpi eq, %17, %29 : vector<16x8xi32>
    %31 = arith.extui %30 : vector<16x8xi1> to vector<16x8xi32>
    %32 = arith.sitofp %31 : vector<16x8xi32> to vector<16x8xf32>
    %33 = arith.addf %25, %32 : vector<16x8xf32>
    %c0_i32_5 = arith.constant 0 : i32
    %c2_i32_6 = arith.constant 2 : i32
    %34 = arith.addi %c0_i32_5, %c2_i32_6 : i32
    %c1_i32_7 = arith.constant 1 : i32
    scf.for %arg3 = %c0_i32_5 to %34 step %c1_i32_7  : i32 {
      %35 = arith.index_cast %arg3 : i32 to index
      %c0 = arith.constant 0 : index
      %c0_9 = arith.constant 0 : index
      %36 = vector.load %arg1[%35, %c0, %c0_9] : memref<2x16x16xf32, #tpu.memory_space<vmem>>, vector<1x16x16xf32>
      %37 = vector.shape_cast %36 : vector<1x16x16xf32> to vector<16x16xf32>
      %cst = arith.constant dense<0.000000e+00> : vector<8x16xf32>
      %38 = tpu.matmul %8, %37, %cst {dimension_numbers = #tpu.dot_dimension_numbers<[1], [0], [0], [1], [0, 0, 1, 1], [], []>} : vector<8x16xf32>, vector<16x16xf32>, vector<8x16xf32> -> vector<8x16xf32>
      %cst_10 = arith.constant dense<0.000000e+00> : vector<8x16xf32>
      %39 = tpu.matmul %15, %37, %cst_10 {dimension_numbers = #tpu.dot_dimension_numbers<[1], [0], [0], [1], [0, 0, 1, 1], [], []>} : vector<8x16xf32>, vector<16x16xf32>, vector<8x16xf32> -> vector<8x16xf32>
      %40 = arith.maximumf %38, %39 : vector<8x16xf32>
      %cst_11 = arith.constant dense<0.000000e+00> : vector<8x16xf32>
      %41 = tpu.matmul %16, %37, %cst_11 {dimension_numbers = #tpu.dot_dimension_numbers<[1], [0], [0], [1], [0, 0, 1, 1], [], []>} : vector<8x16xf32>, vector<16x16xf32>, vector<8x16xf32> -> vector<8x16xf32>
      %cst_12 = arith.constant dense<0.000000e+00> : vector<8x8xf32>
      %42 = tpu.matmul %40, %25, %cst_12 {dimension_numbers = #tpu.dot_dimension_numbers<[1], [0], [0], [1], [0, 0, 1, 1], [], []>} : vector<8x16xf32>, vector<16x8xf32>, vector<8x8xf32> -> vector<8x8xf32>
      %cst_13 = arith.constant dense<0.000000e+00> : vector<8x8xf32>
      %43 = tpu.matmul %40, %32, %cst_13 {dimension_numbers = #tpu.dot_dimension_numbers<[1], [0], [0], [1], [0, 0, 1, 1], [], []>} : vector<8x16xf32>, vector<16x8xf32>, vector<8x8xf32> -> vector<8x8xf32>
      %44 = arith.maximumf %42, %43 : vector<8x8xf32>
      %cst_14 = arith.constant dense<0.000000e+00> : vector<8x8xf32>
      %45 = tpu.matmul %41, %33, %cst_14 {dimension_numbers = #tpu.dot_dimension_numbers<[1], [0], [0], [1], [0, 0, 1, 1], [], []>} : vector<8x16xf32>, vector<16x8xf32>, vector<8x8xf32> -> vector<8x8xf32>
      %cst_15 = arith.constant 2.500000e-01 : f32
      %46 = vector.broadcast %cst_15 : f32 to vector<8x8xf32>
      %47 = arith.mulf %45, %46 : vector<8x8xf32>
      %48 = arith.addf %44, %47 : vector<8x8xf32>
      %cst_16 = arith.constant 5.000000e-01 : f32
      %49 = vector.broadcast %cst_16 : f32 to vector<8x8xf32>
      %50 = arith.mulf %49, %48 : vector<8x8xf32>
      %51 = arith.index_cast %arg3 : i32 to index
      %c0_17 = arith.constant 0 : index
      %c0_18 = arith.constant 0 : index
      %52 = vector.load %arg2[%51, %c0_17, %c0_18] : memref<2x8x8xf32, #tpu.memory_space<vmem>>, vector<1x8x8xf32>
      %53 = vector.shape_cast %52 : vector<1x8x8xf32> to vector<8x8xf32>
      %54 = vector.shape_cast %50 : vector<8x8xf32> to vector<1x8x8xf32>
      tpu.vector_store %arg2[%51, %c0_17, %c0_18], %54 {strides = array<i32>} : memref<2x8x8xf32, #tpu.memory_space<vmem>>, vector<1x8x8xf32>,
    }
    %c2_i32_8 = arith.constant 2 : i32
    return
  }
  func.func @transform_0(%arg0: i32) -> (i32, i32, i32) {
    %c0_i32 = arith.constant 0 : i32
    %c0_i32_0 = arith.constant 0 : i32
    %c0_i32_1 = arith.constant 0 : i32
    return %arg0, %c0_i32, %c0_i32_0 : i32, i32, i32
  }
  func.func @transform_1(%arg0: i32) -> (i32, i32, i32) {
    %c0_i32 = arith.constant 0 : i32
    %c0_i32_0 = arith.constant 0 : i32
    %c0_i32_1 = arith.constant 0 : i32
    return %arg0, %c0_i32, %c0_i32_0 : i32, i32, i32
  }
}

</mosaic_0001>

<llo_original>
// kernel: custom_max_avg_pool2d.1
$region0: #{custom_max_avg_pool2d.1}
  #allocation0 [shape = 'u32[]', space=smem, size = 0x4, offset = 0x4, fixed_abs, tag = 'smem constant byte address 0x4 - core index']
  #allocation1 [shape = 'u32[144,128]{1,0:T(1,128)}', space=vmem, size = 0x12000, scoped, tag = 'internal scratch']
  %s0 = inlined_call_operand.hbm [shape: f32[8,16,16], index: 0, kind: input, shape index: {}]
  %s1 = inlined_call_operand.hbm [shape: f32[8,8,8], index: 1, kind: output, shape index: {}]
  %s2 = sld [smem:[#allocation0]]
  $region48: #{custom_max_avg_pool2d.1} parent=0
    _
  %s4 = ssub.s32 1, %s2
  %s5 = scalar_select 0, %s4, %s2
  $region1: #{custom_max_avg_pool2d.1} parent=0
    #allocation2 [shape = 'u8[32768]{0}', space=vmem, size = 0x8000, scoped, tag = 'input window, operand 0']
    #allocation3 [shape = 's32[2]{0}', space=sflag, size = 0x8, scoped, tag = 'scoped memory for custom_max_avg_pool2d.1']
    #allocation4 [shape = 's32[2]{0}', space=sflag, size = 0x8, scoped, tag = 'scoped memory for custom_max_avg_pool2d.1']
    #allocation5 [shape = 'u8[16384]{0}', space=vmem, size = 0x4000, scoped, tag = 'output window, operand 0']
    %6 = vsyncpa [#allocation3], 0
    %s7 = scalar_lea.sflag [#allocation3], 1
    %8 = vsyncpa %s7, 0
    %9 = vsyncpa [#allocation4], 0
    %s10 = scalar_lea.sflag [#allocation4], 1
    %11 = vsyncpa %s10, 0
    loop: start=0, step=1, limit=6
    $region2: #{custom_max_avg_pool2d.1} parent=1 // loop_pre_header
      _
    $region3: #{custom_max_avg_pool2d.1} parent=1 // loop_header
      %s13 = sphi 0, %s17
      %p14 = scmp.ge.s32.totalorder %s13, 6
      %s23 = sphi 0, %s25
      %s26 = sphi 0, %s23
      %s27 = sphi 0, %s26
      %s43 = sphi 0, %s27
      %s49 = sphi 0, %s51
      %s52 = sphi 0, %s49
      %s53 = sphi 0, %s52
      %s69 = sphi 0, %s53
    $region4: #{custom_max_avg_pool2d.1} parent=1 // loop_header_branch
      %16 = sbr.rel (%p14) target = $region8
    $region5: #{custom_max_avg_pool2d.1} parent=1 // loop_body
      %s18 = ssub.s32 %s13, 1
      %s19 = ssub.s32 %s13, 2
      %s20 = sadd.s32 %s13, 1
      %s21 = ssub.s32 %s13, %s20
      %p22 = scmp.eq.s32.totalorder %s21, 0
      %s24 = sadd.s32 %s23, 1
      %s25 = scalar_select %p22, %s23, %s24
      %p28 = pneg %p22
      %p29 = scmp.eq.s32.totalorder %s13, 3
      %p30 = por %p28, %p29
      %p31 = scmp.ne.s32.totalorder %s23, %s26
      %p32 = scmp.eq.s32.totalorder %s13, 0
      %p33 = por %p31, %p32
      %p34 = scmp.ne.s32.totalorder %s23, %s26
      %p35 = scmp.eq.s32.totalorder %s18, 3
      %p36 = por %p34, %p35
      %p37 = scmp.ne.s32.totalorder %s26, %s27
      %p38 = scmp.eq.s32.totalorder %s18, 0
      %p39 = por %p37, %p38
      %p40 = scmp.ne.s32.totalorder %s26, %s27
      %p41 = scmp.eq.s32.totalorder %s19, 3
      %p42 = por %p40, %p41
      %p44 = scmp.ne.s32.totalorder %s27, %s43
      %p45 = scmp.eq.s32.totalorder %s19, 0
      %p46 = por %p44, %p45
      %s47 = ssub.s32 %s13, %s20
      %p48 = scmp.eq.s32.totalorder %s47, 0
      %s50 = sadd.s32 %s49, 1
      %s51 = scalar_select %p48, %s49, %s50
      %p54 = pneg %p48
      %p55 = scmp.eq.s32.totalorder %s13, 3
      %p56 = por %p54, %p55
      %p57 = scmp.ne.s32.totalorder %s49, %s52
      %p58 = scmp.eq.s32.totalorder %s13, 0
      %p59 = por %p57, %p58
      %p60 = scmp.ne.s32.totalorder %s49, %s52
      %p61 = scmp.eq.s32.totalorder %s18, 3
      %p62 = por %p60, %p61
      %p63 = scmp.ne.s32.totalorder %s52, %s53
      %p64 = scmp.eq.s32.totalorder %s18, 0
      %p65 = por %p63, %p64
      %p66 = scmp.ne.s32.totalorder %s52, %s53
      %p67 = scmp.eq.s32.totalorder %s19, 3
      %p68 = por %p66, %p67
      %p70 = scmp.ne.s32.totalorder %s53, %s69
      %p71 = scmp.eq.s32.totalorder %s19, 0
      %p72 = por %p70, %p71
      %p73 = scmp.le.s32.totalorder 1, %s13
      %p74 = scmp.lt.s32.totalorder %s13, 5
      %p75 = pnand %p73, %p74
      %p76 = pneg %p75
      // Predicated region
      $region9: #{custom_max_avg_pool2d.1} parent=5 // pred_check
        _
      $region10: #{custom_max_avg_pool2d.1} parent=5 // pred_check_branch
        %78 = sbr.rel (%p75) target = $region12
      $region11: #{custom_max_avg_pool2d.1} parent=5 // pred_region
        %s79 = ssub.s32 %s13, 1
      $region12: #{custom_max_avg_pool2d.1} parent=5 // pred_fallthru
        _
      %p80 = scmp.lt.s32.totalorder %s13, 4
      // Predicated region
      $region13: #{custom_max_avg_pool2d.1} parent=5 // pred_check
        %p81 = pneg %p80
      $region14: #{custom_max_avg_pool2d.1} parent=5 // pred_check_branch
        %83 = sbr.rel (%p81) target = $region16
      $region15: #{custom_max_avg_pool2d.1} parent=5 // pred_region
        // Predicated region
        $region17: #{custom_max_avg_pool2d.1} parent=15 // pred_check
          %p84 = pneg %p33
        $region18: #{custom_max_avg_pool2d.1} parent=15 // pred_check_branch
          %86 = sbr.rel (%p84) target = $region20
        $region19: #{custom_max_avg_pool2d.1} parent=15 // pred_region
          %s87 = sand.u32 %s23, 1
          %s88 = scalar_lea.sflag [#allocation3], %s87
          %s89 = sand.u32 %s23, 1
          %s90 = smul.addr %s89, 32
          %s91 = scalar_lea.vmem [#allocation2], %s90
          %s92 = smul.u32 2, %s13
          %s94 = ssub.s32 512, 512
          %95 = vsyncadd %s88, %s94
          %s96 = smul.addr %s92, 2
          %s97 = smul.addr %s96, 128
          %s98 = scalar_lea.hbm %s0, %s97
          %s99 = sshll.u32 %s91, 4
          %s100 = int_to_ptr.vmem [resolvable:$true] %s99
          %105 = dma.hbm_to_vmem [thread:$0]  %s98, 512, %s100, %s88, 128, 128, 8
        $region20: #{custom_max_avg_pool2d.1} parent=15 // pred_fallthru
          _
      $region16: #{custom_max_avg_pool2d.1} parent=5 // pred_fallthru
        _
      %p106 = scmp.le.s32.totalorder 1, %s13
      %p107 = scmp.lt.s32.totalorder %s13, 5
      %p108 = pnand %p106, %p107
      %p109 = pneg %p108
      // Predicated region
      $region21: #{custom_max_avg_pool2d.1} parent=5 // pred_check
        _
      $region22: #{custom_max_avg_pool2d.1} parent=5 // pred_check_branch
        %111 = sbr.rel (%p108) target = $region24
      $region23: #{custom_max_avg_pool2d.1} parent=5 // pred_region
        %s112 = ssub.s32 %s13, 1
        %s113 = sand.u32 %s26, 1
        %s114 = scalar_lea.sflag [#allocation3], %s113
        %s115 = sand.u32 %s26, 1
        %s116 = smul.addr %s115, 32
        %s117 = scalar_lea.vmem [#allocation2], %s116
        // Predicated region
        $region25: #{custom_max_avg_pool2d.1} parent=23 // pred_check
          %p118 = pneg %p39
        $region26: #{custom_max_avg_pool2d.1} parent=23 // pred_check_branch
          %120 = sbr.rel (%p118) target = $region28
        $region27: #{custom_max_avg_pool2d.1} parent=23 // pred_region
          %121 = dma.done %s114, 512
        $region28: #{custom_max_avg_pool2d.1} parent=23 // pred_fallthru
          _
        %s122 = sand.u32 %s26, 1
        %s123 = scalar_lea.sflag [#allocation3], %s122
        %s124 = sand.u32 %s26, 1
        %s125 = smul.addr %s124, 32
        %s126 = scalar_lea.vmem [#allocation2], %s125
        %p127 = pneg %p39
        %p128 = pneg %p36
        %p129 = pneg %p65
        %p130 = pneg %p62
        %s131 = sand.u32 %s52, 1
        %s132 = scalar_lea.sflag [#allocation4], %s131
        %s133 = sand.u32 %s52, 1
        %s134 = smul.addr %s133, 16
        %s135 = scalar_lea.vmem [#allocation5], %s134
        %s136 = smul.u32 2, %s18
        %s137 = smul.u32 2, %s18
        %v138 = vlaneseq
        %v139 = vshrl.u32 %v138, 7
        %v140 = vlaneseq
        %v141 = vand.u32 %v140, 127
        %v142 = vmul.u32 %v139, 2
        %vm143 = vcmp.eq.s32.totalorder %v141, %v142
        %v144 = vsel %vm143, 1, 0
        %v145 = vcvt.s32.f32 %v144
        %v146 = vadd.s32 %v142, 1
        %vm147 = vcmp.eq.s32.totalorder %v141, %v146
        %v148 = vsel %vm147, 1, 0
        %v149 = vcvt.s32.f32 %v148
        %v150 = vadd.f32 %v145, %v149
        %v151 = vadd.s32 %v139, 8
        %v152 = vmul.u32 %v141, 2
        %vm153 = vcmp.eq.s32.totalorder %v139, %v152
        %vm154 = vcmp.eq.s32.totalorder %v151, %v152
        %v155 = vsel %vm153, 1, 0
        %v156 = vsel %vm154, 1, 0
        %v157 = vcvt.s32.f32 %v155
        %v158 = vcvt.s32.f32 %v156
        %v159 = vadd.s32 %v152, 1
        %vm160 = vcmp.eq.s32.totalorder %v139, %v159
        %vm161 = vcmp.eq.s32.totalorder %v151, %v159
        %v162 = vsel %vm160, 1, 0
        %v163 = vsel %vm161, 1, 0
        %v164 = vcvt.s32.f32 %v162
        %v165 = vcvt.s32.f32 %v163
        %v166 = vadd.f32 %v157, %v164
        %v167 = vadd.f32 %v158, %v165
        loop: start=0, step=1, limit=2
        $region29: #{custom_max_avg_pool2d.1} parent=23 // loop_pre_header
          _
        $region30: #{custom_max_avg_pool2d.1} parent=23 // loop_header
          %s169 = sphi 0, %s173
          %p170 = scmp.ge.s32.totalorder %s169, 2
        $region31: #{custom_max_avg_pool2d.1} parent=23 // loop_header_branch
          %172 = sbr.rel (%p170) target = $region35
        $region32: #{custom_max_avg_pool2d.1} parent=23 // loop_body
          %s174 = smul.u32 %s169, 16
          %s175 = scalar_lea.vmem %s117, %s174 [#allocation2]
          %v176 = vld [vmem:[%s175] sm:$0xff]
          %v177 = vld [vmem:[%s175 + $0x8] sm:$0xff]
          %vm178 = vcmask 130048
          %v180 = vsel %vm178, %v145, 0
          %182 = vmatprep.subr.mxu0 0.0
          %183 = vmatpush1.msra.mxu0 0.0
          %184 = vmatprep.subr.mxu0 0.0
          %185 = vmatpush1.msra.mxu0 0.0
          %186 = vmatprep.subr.mxu0 0.0
          %187 = vmatpush1.msra.mxu0 0.0
          %188 = vmatprep.subr.mxu0 0.0
          %189 = vmatpush1.msra.mxu0 0.0
          %190 = vmatprep.subr.mxu0 0.0
          %191 = vmatpush1.msra.mxu0 0.0
          %192 = vmatprep.subr.mxu0 0.0
          %193 = vmatpush1.msra.mxu0 0.0
          %194 = vmatprep.subr.mxu0 0.0
          %195 = vmatpush1.msra.mxu0 0.0
          %196 = vmatprep.subr.mxu0 0.0
          %197 = vmatpush1.msra.mxu0 0.0
          %198 = vmatprep.subr.mxu0 0.0
          %199 = vmatpush1.msra.mxu0 0.0
          %200 = vmatprep.subr.mxu0 0.0
          %201 = vmatpush1.msra.mxu0 0.0
          %202 = vmatprep.subr.mxu0 0.0
          %203 = vmatpush1.msra.mxu0 0.0
          %204 = vmatprep.subr.mxu0 0.0
          %205 = vmatpush1.msra.mxu0 0.0
          %206 = vmatprep.subr.mxu0 0.0
          %207 = vmatpush1.msra.mxu0 0.0
          %208 = vmatprep.subr.mxu0 0.0
          %209 = vmatpush1.msra.mxu0 0.0
          %210 = vmatprep.subr.mxu0 0.0
          %211 = vmatpush1.msra.mxu0 %v177
          %212 = vmatprep.subr.mxu0 0.0
          %213 = vmatpush1.msra.mxu0 %v176
          %214 = vmatprep.subr.mxu0 0.0
          %215 = vmatpush2.msra.mxu0 0.0
          %216 = vmatprep.subr.mxu0 0.0
          %217 = vmatpush2.msra.mxu0 0.0
          %218 = vmatprep.subr.mxu0 0.0
          %219 = vmatpush2.msra.mxu0 0.0
          %220 = vmatprep.subr.mxu0 0.0
          %221 = vmatpush2.msra.mxu0 0.0
          %222 = vmatprep.subr.mxu0 0.0
          %223 = vmatpush2.msra.mxu0 0.0
          %224 = vmatprep.subr.mxu0 0.0
          %225 = vmatpush2.msra.mxu0 0.0
          %226 = vmatprep.subr.mxu0 0.0
          %227 = vmatpush2.msra.mxu0 0.0
          %228 = vmatprep.subr.mxu0 0.0
          %229 = vmatpush2.msra.mxu0 0.0
          %230 = vmatprep.subr.mxu0 0.0
          %231 = vmatpush2.msra.mxu0 0.0
          %232 = vmatprep.subr.mxu0 0.0
          %233 = vmatpush2.msra.mxu0 0.0
          %234 = vmatprep.subr.mxu0 0.0
          %235 = vmatpush2.msra.mxu0 0.0
          %236 = vmatprep.subr.mxu0 0.0
          %237 = vmatpush2.msra.mxu0 0.0
          %238 = vmatprep.subr.mxu0 0.0
          %239 = vmatpush2.msra.mxu0 0.0
          %240 = vmatprep.subr.mxu0 0.0
          %241 = vmatpush2.msra.mxu0 0.0
          %242 = vmatprep.subr.mxu0 0.0
          %243 = vmatpush2.msra.mxu0 0.0
          %244 = vmatprep.subr.mxu0 0.0
          %245 = vmatpush2.msra.mxu0 0.0
          %246 = vmatprep.mubr.f32.mxu0 0.0
          %247 = vmatmul.mubr.f32.gmra.mxu0 %v180
          %v248 = vpop.f32.mrf.mxu0
          %v249 = vadd.f32 0.0, %v248
          %v250 = vpop.f32.mrf.mxu0
          %251 = vdwg.mxu0
          %v253 = vsel %vm178, %v149, 0
          %255 = vmatprep.subr.mxu0 0.0
          %256 = vmatpush1.msra.mxu0 0.0
          %257 = vmatprep.subr.mxu0 0.0
          %258 = vmatpush1.msra.mxu0 0.0
          %259 = vmatprep.subr.mxu0 0.0
          %260 = vmatpush1.msra.mxu0 0.0
          %261 = vmatprep.subr.mxu0 0.0
          %262 = vmatpush1.msra.mxu0 0.0
          %263 = vmatprep.subr.mxu0 0.0
          %264 = vmatpush1.msra.mxu0 0.0
          %265 = vmatprep.subr.mxu0 0.0
          %266 = vmatpush1.msra.mxu0 0.0
          %267 = vmatprep.subr.mxu0 0.0
          %268 = vmatpush1.msra.mxu0 0.0
          %269 = vmatprep.subr.mxu0 0.0
          %270 = vmatpush1.msra.mxu0 0.0
          %271 = vmatprep.subr.mxu0 0.0
          %272 = vmatpush1.msra.mxu0 0.0
          %273 = vmatprep.subr.mxu0 0.0
          %274 = vmatpush1.msra.mxu0 0.0
          %275 = vmatprep.subr.mxu0 0.0
          %276 = vmatpush1.msra.mxu0 0.0
          %277 = vmatprep.subr.mxu0 0.0
          %278 = vmatpush1.msra.mxu0 0.0
          %279 = vmatprep.subr.mxu0 0.0
          %280 = vmatpush1.msra.mxu0 0.0
          %281 = vmatprep.subr.mxu0 0.0
          %282 = vmatpush1.msra.mxu0 0.0
          %283 = vmatprep.subr.mxu0 0.0
          %284 = vmatpush1.msra.mxu0 %v177
          %285 = vmatprep.subr.mxu0 0.0
          %286 = vmatpush1.msra.mxu0 %v176
          %287 = vmatprep.subr.mxu0 0.0
          %288 = vmatpush2.msra.mxu0 0.0
          %289 = vmatprep.subr.mxu0 0.0
          %290 = vmatpush2.msra.mxu0 0.0
          %291 = vmatprep.subr.mxu0 0.0
          %292 = vmatpush2.msra.mxu0 0.0
          %293 = vmatprep.subr.mxu0 0.0
          %294 = vmatpush2.msra.mxu0 0.0
          %295 = vmatprep.subr.mxu0 0.0
          %296 = vmatpush2.msra.mxu0 0.0
          %297 = vmatprep.subr.mxu0 0.0
          %298 = vmatpush2.msra.mxu0 0.0
          %299 = vmatprep.subr.mxu0 0.0
          %300 = vmatpush2.msra.mxu0 0.0
          %301 = vmatprep.subr.mxu0 0.0
          %302 = vmatpush2.msra.mxu0 0.0
          %303 = vmatprep.subr.mxu0 0.0
          %304 = vmatpush2.msra.mxu0 0.0
          %305 = vmatprep.subr.mxu0 0.0
          %306 = vmatpush2.msra.mxu0 0.0
          %307 = vmatprep.subr.mxu0 0.0
          %308 = vmatpush2.msra.mxu0 0.0
          %309 = vmatprep.subr.mxu0 0.0
          %310 = vmatpush2.msra.mxu0 0.0
          %311 = vmatprep.subr.mxu0 0.0
          %312 = vmatpush2.msra.mxu0 0.0
          %313 = vmatprep.subr.mxu0 0.0
          %314 = vmatpush2.msra.mxu0 0.0
          %315 = vmatprep.subr.mxu0 0.0
          %316 = vmatpush2.msra.mxu0 0.0
          %317 = vmatprep.subr.mxu0 0.0
          %318 = vmatpush2.msra.mxu0 0.0
          %319 = vmatprep.mubr.f32.mxu0 0.0
          %320 = vmatmul.mubr.f32.gmra.mxu0 %v253
          %v321 = vpop.f32.mrf.mxu0
          %v322 = vadd.f32 0.0, %v321
          %v323 = vpop.f32.mrf.mxu0
          %324 = vdwg.mxu0
          %v325 = vmax.f32 %v249, %v322
          %v327 = vsel %vm178, %v150, 0
          %329 = vmatprep.subr.mxu0 0.0
          %330 = vmatpush1.msra.mxu0 0.0
          %331 = vmatprep.subr.mxu0 0.0
          %332 = vmatpush1.msra.mxu0 0.0
          %333 = vmatprep.subr.mxu0 0.0
          %334 = vmatpush1.msra.mxu0 0.0
          %335 = vmatprep.subr.mxu0 0.0
          %336 = vmatpush1.msra.mxu0 0.0
          %337 = vmatprep.subr.mxu0 0.0
          %338 = vmatpush1.msra.mxu0 0.0
          %339 = vmatprep.subr.mxu0 0.0
          %340 = vmatpush1.msra.mxu0 0.0
          %341 = vmatprep.subr.mxu0 0.0
          %342 = vmatpush1.msra.mxu0 0.0
          %343 = vmatprep.subr.mxu0 0.0
          %344 = vmatpush1.msra.mxu0 0.0
          %345 = vmatprep.subr.mxu0 0.0
          %346 = vmatpush1.msra.mxu0 0.0
          %347 = vmatprep.subr.mxu0 0.0
          %348 = vmatpush1.msra.mxu0 0.0
          %349 = vmatprep.subr.mxu0 0.0
          %350 = vmatpush1.msra.mxu0 0.0
          %351 = vmatprep.subr.mxu0 0.0
          %352 = vmatpush1.msra.mxu0 0.0
          %353 = vmatprep.subr.mxu0 0.0
          %354 = vmatpush1.msra.mxu0 0.0
          %355 = vmatprep.subr.mxu0 0.0
          %356 = vmatpush1.msra.mxu0 0.0
          %357 = vmatprep.subr.mxu0 0.0
          %358 = vmatpush1.msra.mxu0 %v177
          %359 = vmatprep.subr.mxu0 0.0
          %360 = vmatpush1.msra.mxu0 %v176
          %361 = vmatprep.subr.mxu0 0.0
          %362 = vmatpush2.msra.mxu0 0.0
          %363 = vmatprep.subr.mxu0 0.0
          %364 = vmatpush2.msra.mxu0 0.0
          %365 = vmatprep.subr.mxu0 0.0
          %366 = vmatpush2.msra.mxu0 0.0
          %367 = vmatprep.subr.mxu0 0.0
          %368 = vmatpush2.msra.mxu0 0.0
          %369 = vmatprep.subr.mxu0 0.0
          %370 = vmatpush2.msra.mxu0 0.0
          %371 = vmatprep.subr.mxu0 0.0
          %372 = vmatpush2.msra.mxu0 0.0
          %373 = vmatprep.subr.mxu0 0.0
          %374 = vmatpush2.msra.mxu0 0.0
          %375 = vmatprep.subr.mxu0 0.0
          %376 = vmatpush2.msra.mxu0 0.0
          %377 = vmatprep.subr.mxu0 0.0
          %378 = vmatpush2.msra.mxu0 0.0
          %379 = vmatprep.subr.mxu0 0.0
          %380 = vmatpush2.msra.mxu0 0.0
          %381 = vmatprep.subr.mxu0 0.0
          %382 = vmatpush2.msra.mxu0 0.0
          %383 = vmatprep.subr.mxu0 0.0
          %384 = vmatpush2.msra.mxu0 0.0
          %385 = vmatprep.subr.mxu0 0.0
          %386 = vmatpush2.msra.mxu0 0.0
          %387 = vmatprep.subr.mxu0 0.0
          %388 = vmatpush2.msra.mxu0 0.0
          %389 = vmatprep.subr.mxu0 0.0
          %390 = vmatpush2.msra.mxu0 0.0
          %391 = vmatprep.subr.mxu0 0.0
          %392 = vmatpush2.msra.mxu0 0.0
          %393 = vmatprep.mubr.f32.mxu0 0.0
          %394 = vmatmul.mubr.f32.gmra.mxu0 %v327
          %v395 = vpop.f32.mrf.mxu0
          %v396 = vadd.f32 0.0, %v395
          %v397 = vpop.f32.mrf.mxu0
          %398 = vdwg.mxu0
          %v400 = vsel %vm178, %v325, 0
          %402 = vmatprep.subr.mxu0 0.0
          %403 = vmatpush1.msra.mxu0 0.0
          %404 = vmatprep.subr.mxu0 0.0
          %405 = vmatpush1.msra.mxu0 0.0
          %406 = vmatprep.subr.mxu0 0.0
          %407 = vmatpush1.msra.mxu0 0.0
          %408 = vmatprep.subr.mxu0 0.0
          %409 = vmatpush1.msra.mxu0 0.0
          %410 = vmatprep.subr.mxu0 0.0
          %411 = vmatpush1.msra.mxu0 0.0
          %412 = vmatprep.subr.mxu0 0.0
          %413 = vmatpush1.msra.mxu0 0.0
          %414 = vmatprep.subr.mxu0 0.0
          %415 = vmatpush1.msra.mxu0 0.0
          %416 = vmatprep.subr.mxu0 0.0
          %417 = vmatpush1.msra.mxu0 0.0
          %418 = vmatprep.subr.mxu0 0.0
          %419 = vmatpush1.msra.mxu0 0.0
          %420 = vmatprep.subr.mxu0 0.0
          %421 = vmatpush1.msra.mxu0 0.0
          %422 = vmatprep.subr.mxu0 0.0
          %423 = vmatpush1.msra.mxu0 0.0
          %424 = vmatprep.subr.mxu0 0.0
          %425 = vmatpush1.msra.mxu0 0.0
          %426 = vmatprep.subr.mxu0 0.0
          %427 = vmatpush1.msra.mxu0 0.0
          %428 = vmatprep.subr.mxu0 0.0
          %429 = vmatpush1.msra.mxu0 0.0
          %430 = vmatprep.subr.mxu0 0.0
          %431 = vmatpush1.msra.mxu0 %v158
          %432 = vmatprep.subr.mxu0 0.0
          %433 = vmatpush1.msra.mxu0 %v157
          %434 = vmatprep.subr.mxu0 0.0
          %435 = vmatpush2.msra.mxu0 0.0
          %436 = vmatprep.subr.mxu0 0.0
          %437 = vmatpush2.msra.mxu0 0.0
          %438 = vmatprep.subr.mxu0 0.0
          %439 = vmatpush2.msra.mxu0 0.0
          %440 = vmatprep.subr.mxu0 0.0
          %441 = vmatpush2.msra.mxu0 0.0
          %442 = vmatprep.subr.mxu0 0.0
          %443 = vmatpush2.msra.mxu0 0.0
          %444 = vmatprep.subr.mxu0 0.0
          %445 = vmatpush2.msra.mxu0 0.0
          %446 = vmatprep.subr.mxu0 0.0
          %447 = vmatpush2.msra.mxu0 0.0
          %448 = vmatprep.subr.mxu0 0.0
          %449 = vmatpush2.msra.mxu0 0.0
          %450 = vmatprep.subr.mxu0 0.0
          %451 = vmatpush2.msra.mxu0 0.0
          %452 = vmatprep.subr.mxu0 0.0
          %453 = vmatpush2.msra.mxu0 0.0
          %454 = vmatprep.subr.mxu0 0.0
          %455 = vmatpush2.msra.mxu0 0.0
          %456 = vmatprep.subr.mxu0 0.0
          %457 = vmatpush2.msra.mxu0 0.0
          %458 = vmatprep.subr.mxu0 0.0
          %459 = vmatpush2.msra.mxu0 0.0
          %460 = vmatprep.subr.mxu0 0.0
          %461 = vmatpush2.msra.mxu0 0.0
          %462 = vmatprep.subr.mxu0 0.0
          %463 = vmatpush2.msra.mxu0 0.0
          %464 = vmatprep.subr.mxu0 0.0
          %465 = vmatpush2.msra.mxu0 0.0
          %466 = vmatprep.mubr.f32.mxu0 0.0
          %467 = vmatmul.mubr.f32.gmra.mxu0 %v400
          %v468 = vpop.f32.mrf.mxu0
          %v469 = vadd.f32 0.0, %v468
          %v470 = vpop.f32.mrf.mxu0
          %471 = vdwg.mxu0
          %472 = vmatprep.subr.mxu0 0.0
          %473 = vmatpush1.msra.mxu0 0.0
          %474 = vmatprep.subr.mxu0 0.0
          %475 = vmatpush1.msra.mxu0 0.0
          %476 = vmatprep.subr.mxu0 0.0
          %477 = vmatpush1.msra.mxu0 0.0
          %478 = vmatprep.subr.mxu0 0.0
          %479 = vmatpush1.msra.mxu0 0.0
          %480 = vmatprep.subr.mxu0 0.0
          %481 = vmatpush1.msra.mxu0 0.0
          %482 = vmatprep.subr.mxu0 0.0
          %483 = vmatpush1.msra.mxu0 0.0
          %484 = vmatprep.subr.mxu0 0.0
          %485 = vmatpush1.msra.mxu0 0.0
          %486 = vmatprep.subr.mxu0 0.0
          %487 = vmatpush1.msra.mxu0 0.0
          %488 = vmatprep.subr.mxu0 0.0
          %489 = vmatpush1.msra.mxu0 0.0
          %490 = vmatprep.subr.mxu0 0.0
          %491 = vmatpush1.msra.mxu0 0.0
          %492 = vmatprep.subr.mxu0 0.0
          %493 = vmatpush1.msra.mxu0 0.0
          %494 = vmatprep.subr.mxu0 0.0
          %495 = vmatpush1.msra.mxu0 0.0
          %496 = vmatprep.subr.mxu0 0.0
          %497 = vmatpush1.msra.mxu0 0.0
          %498 = vmatprep.subr.mxu0 0.0
          %499 = vmatpush1.msra.mxu0 0.0
          %500 = vmatprep.subr.mxu0 0.0
          %501 = vmatpush1.msra.mxu0 %v165
          %502 = vmatprep.subr.mxu0 0.0
          %503 = vmatpush1.msra.mxu0 %v164
          %504 = vmatprep.subr.mxu0 0.0
          %505 = vmatpush2.msra.mxu0 0.0
          %506 = vmatprep.subr.mxu0 0.0
          %507 = vmatpush2.msra.mxu0 0.0
          %508 = vmatprep.subr.mxu0 0.0
          %509 = vmatpush2.msra.mxu0 0.0
          %510 = vmatprep.subr.mxu0 0.0
          %511 = vmatpush2.msra.mxu0 0.0
          %512 = vmatprep.subr.mxu0 0.0
          %513 = vmatpush2.msra.mxu0 0.0
          %514 = vmatprep.subr.mxu0 0.0
          %515 = vmatpush2.msra.mxu0 0.0
          %516 = vmatprep.subr.mxu0 0.0
          %517 = vmatpush2.msra.mxu0 0.0
          %518 = vmatprep.subr.mxu0 0.0
          %519 = vmatpush2.msra.mxu0 0.0
          %520 = vmatprep.subr.mxu0 0.0
          %521 = vmatpush2.msra.mxu0 0.0
          %522 = vmatprep.subr.mxu0 0.0
          %523 = vmatpush2.msra.mxu0 0.0
          %524 = vmatprep.subr.mxu0 0.0
          %525 = vmatpush2.msra.mxu0 0.0
          %526 = vmatprep.subr.mxu0 0.0
          %527 = vmatpush2.msra.mxu0 0.0
          %528 = vmatprep.subr.mxu0 0.0
          %529 = vmatpush2.msra.mxu0 0.0
          %530 = vmatprep.subr.mxu0 0.0
          %531 = vmatpush2.msra.mxu0 0.0
          %532 = vmatprep.subr.mxu0 0.0
          %533 = vmatpush2.msra.mxu0 0.0
          %534 = vmatprep.subr.mxu0 0.0
          %535 = vmatpush2.msra.mxu0 0.0
          %536 = vmatprep.mubr.f32.mxu0 0.0
          %537 = vmatmul.mubr.f32.gmra.mxu0 %v400
          %v538 = vpop.f32.mrf.mxu0
          %v539 = vadd.f32 0.0, %v538
          %v540 = vpop.f32.mrf.mxu0
          %541 = vdwg.mxu0
          %v542 = vmax.f32 %v469, %v539
          %v544 = vsel %vm178, %v396, 0
          %546 = vmatprep.subr.mxu0 0.0
          %547 = vmatpush1.msra.mxu0 0.0
          %548 = vmatprep.subr.mxu0 0.0
          %549 = vmatpush1.msra.mxu0 0.0
          %550 = vmatprep.subr.mxu0 0.0
          %551 = vmatpush1.msra.mxu0 0.0
          %552 = vmatprep.subr.mxu0 0.0
          %553 = vmatpush1.msra.mxu0 0.0
          %554 = vmatprep.subr.mxu0 0.0
          %555 = vmatpush1.msra.mxu0 0.0
          %556 = vmatprep.subr.mxu0 0.0
          %557 = vmatpush1.msra.mxu0 0.0
          %558 = vmatprep.subr.mxu0 0.0
          %559 = vmatpush1.msra.mxu0 0.0
          %560 = vmatprep.subr.mxu0 0.0
          %561 = vmatpush1.msra.mxu0 0.0
          %562 = vmatprep.subr.mxu0 0.0
          %563 = vmatpush1.msra.mxu0 0.0
          %564 = vmatprep.subr.mxu0 0.0
          %565 = vmatpush1.msra.mxu0 0.0
          %566 = vmatprep.subr.mxu0 0.0
          %567 = vmatpush1.msra.mxu0 0.0
          %568 = vmatprep.subr.mxu0 0.0
          %569 = vmatpush1.msra.mxu0 0.0
          %570 = vmatprep.subr.mxu0 0.0
          %571 = vmatpush1.msra.mxu0 0.0
          %572 = vmatprep.subr.mxu0 0.0
          %573 = vmatpush1.msra.mxu0 0.0
          %574 = vmatprep.subr.mxu0 0.0
          %575 = vmatpush1.msra.mxu0 %v167
          %576 = vmatprep.subr.mxu0 0.0
          %577 = vmatpush1.msra.mxu0 %v166
          %578 = vmatprep.subr.mxu0 0.0
          %579 = vmatpush2.msra.mxu0 0.0
          %580 = vmatprep.subr.mxu0 0.0
          %581 = vmatpush2.msra.mxu0 0.0
          %582 = vmatprep.subr.mxu0 0.0
          %583 = vmatpush2.msra.mxu0 0.0
          %584 = vmatprep.subr.mxu0 0.0
          %585 = vmatpush2.msra.mxu0 0.0
          %586 = vmatprep.subr.mxu0 0.0
          %587 = vmatpush2.msra.mxu0 0.0
          %588 = vmatprep.subr.mxu0 0.0
          %589 = vmatpush2.msra.mxu0 0.0
          %590 = vmatprep.subr.mxu0 0.0
          %591 = vmatpush2.msra.mxu0 0.0
          %592 = vmatprep.subr.mxu0 0.0
          %593 = vmatpush2.msra.mxu0 0.0
          %594 = vmatprep.subr.mxu0 0.0
          %595 = vmatpush2.msra.mxu0 0.0
          %596 = vmatprep.subr.mxu0 0.0
          %597 = vmatpush2.msra.mxu0 0.0
          %598 = vmatprep.subr.mxu0 0.0
          %599 = vmatpush2.msra.mxu0 0.0
          %600 = vmatprep.subr.mxu0 0.0
          %601 = vmatpush2.msra.mxu0 0.0
          %602 = vmatprep.subr.mxu0 0.0
          %603 = vmatpush2.msra.mxu0 0.0
          %604 = vmatprep.subr.mxu0 0.0
          %605 = vmatpush2.msra.mxu0 0.0
          %606 = vmatprep.subr.mxu0 0.0
          %607 = vmatpush2.msra.mxu0 0.0
          %608 = vmatprep.subr.mxu0 0.0
          %609 = vmatpush2.msra.mxu0 0.0
          %610 = vmatprep.mubr.f32.mxu0 0.0
          %611 = vmatmul.mubr.f32.gmra.mxu0 %v544
          %v612 = vpop.f32.mrf.mxu0
          %v613 = vadd.f32 0.0, %v612
          %v614 = vpop.f32.mrf.mxu0
          %615 = vdwg.mxu0
          %v616 = vmul.f32 %v613, 0.25
          %v617 = vadd.f32 %v542, %v616
          %v618 = vmul.f32 %v617, 0.5
          %s619 = smul.u32 %s169, 8
          %s620 = scalar_lea.vmem %s135, %s619 [#allocation5]
          %vm621 = vcmask 64512
          %622 = vst.msk [vmem:[%s620] sm:$0xff] %vm621, %v618
        $region33: #{custom_max_avg_pool2d.1} parent=23 // loop_footer
          %s173 = sadd.s32 1, %s169
        $region34: #{custom_max_avg_pool2d.1} parent=23 // loop_footer_branch
          %168 = sbr.rel target = $region30
        $region35: #{custom_max_avg_pool2d.1} parent=23 // loop_exit
          _
        %s623 = sand.u32 %s52, 1
        %s624 = scalar_lea.sflag [#allocation4], %s623
        %s625 = sand.u32 %s52, 1
        %s626 = smul.addr %s625, 16
        %s627 = scalar_lea.vmem [#allocation5], %s626
        // Predicated region
        $region36: #{custom_max_avg_pool2d.1} parent=23 // pred_check
          %p628 = pneg %p62
        $region37: #{custom_max_avg_pool2d.1} parent=23 // pred_check_branch
          %630 = sbr.rel (%p628) target = $region39
        $region38: #{custom_max_avg_pool2d.1} parent=23 // pred_region
          %s631 = smul.u32 2, %s18
          %s633 = ssub.s32 256, 256
          %634 = vsyncadd %s624, %s633
          %s635 = smul.addr %s631, 128
          %s636 = scalar_lea.hbm %s1, %s635
          %s637 = sshll.u32 %s627, 4
          %s638 = int_to_ptr.vmem [resolvable:$true] %s637
          %643 = dma.vmem_to_hbm [thread:$0]  %s638, 256, %s636, %s624, 128, 128, 8
        $region39: #{custom_max_avg_pool2d.1} parent=23 // pred_fallthru
          _
      $region24: #{custom_max_avg_pool2d.1} parent=5 // pred_fallthru
        _
      %p644 = scmp.le.s32.totalorder 2, %s13
      // Predicated region
      $region40: #{custom_max_avg_pool2d.1} parent=5 // pred_check
        %p645 = pneg %p644
      $region41: #{custom_max_avg_pool2d.1} parent=5 // pred_check_branch
        %647 = sbr.rel (%p645) target = $region43
      $region42: #{custom_max_avg_pool2d.1} parent=5 // pred_region
        %s648 = ssub.s32 %s13, 2
        // Predicated region
        $region44: #{custom_max_avg_pool2d.1} parent=42 // pred_check
          %p649 = pneg %p68
        $region45: #{custom_max_avg_pool2d.1} parent=42 // pred_check_branch
          %651 = sbr.rel (%p649) target = $region47
        $region46: #{custom_max_avg_pool2d.1} parent=42 // pred_region
          %s652 = sand.u32 %s53, 1
          %s653 = scalar_lea.sflag [#allocation4], %s652
          %s654 = sand.u32 %s53, 1
          %s655 = smul.addr %s654, 16
          %s656 = scalar_lea.vmem [#allocation5], %s655
          %657 = dma.done %s653, 256
        $region47: #{custom_max_avg_pool2d.1} parent=42 // pred_fallthru
          _
      $region43: #{custom_max_avg_pool2d.1} parent=5 // pred_fallthru
        _
    $region6: #{custom_max_avg_pool2d.1} parent=1 // loop_footer
      %s17 = sadd.s32 1, %s13
    $region7: #{custom_max_avg_pool2d.1} parent=1 // loop_footer_branch
      %12 = sbr.rel target = $region3
    $region8: #{custom_max_avg_pool2d.1} parent=1 // loop_exit
      _
    %658 = vsyncpa [#allocation3], 1
    %s659 = scalar_lea.sflag [#allocation3], 1
    %660 = vsyncpa %s659, 1
    %661 = vsyncpa [#allocation4], 1
    %s662 = scalar_lea.sflag [#allocation4], 1
    %663 = vsyncpa %s662, 1

</llo_original>
